<compile_context>
chip_gen: v7x
topology: tpu7x:2x2x1
jax: 0.10.0
libtpu: 0.0.40
codegen_flags: <defaults>
</compile_context>

<pallas_src>
import functools
import math

import jax
import jax.numpy as jnp
from jax import lax
from jax.experimental import pallas as pl
from jax.experimental.pallas import tpu as pltpu


# ---------------------------------------------------------------------------
# helpers
# ---------------------------------------------------------------------------
def _round_up(x, m):
    return ((x + m - 1) // m) * m


def _gelu(x, approx):
    """GELU in f32. approx=True -> tanh form (EUP slot, cheap on all gens);
    approx=False -> exact erf form matching PyTorch nn.GELU() defaults."""
    if approx:
        c = jnp.float32(math.sqrt(2.0 / math.pi))
        return 0.5 * x * (1.0 + jnp.tanh(c * (x + jnp.float32(0.044715) * x * x * x)))
    return 0.5 * x * (1.0 + lax.erf(x * jnp.float32(1.0 / math.sqrt(2.0))))


def _layernorm(y, gamma, beta, d_real, eps=1e-5):
    """LayerNorm over the last dim. y:(tm, Dp) f32 whose padded lanes (>= d_real)
    are exactly zero; gamma/beta:(1, Dp) zero-padded."""
    dp = y.shape[-1]
    inv_d = jnp.float32(1.0 / d_real)
    mean = jnp.sum(y, axis=-1, keepdims=True) * inv_d        # padded lanes contribute 0
    c = y - mean
    if dp == d_real:
        var = jnp.sum(c * c, axis=-1, keepdims=True) * inv_d
    else:
        lane = lax.broadcasted_iota(jnp.int32, y.shape, 1)
        var = jnp.sum(jnp.where(lane < d_real, c * c, 0.0), axis=-1,
                      keepdims=True) * inv_d
    inv = lax.rsqrt(var + jnp.float32(eps))
    return c * inv * gamma.astype(jnp.float32) + beta.astype(jnp.float32)


# ---------------------------------------------------------------------------
# kernels
# ---------------------------------------------------------------------------
def _ffn_ln_kernel_resident(x_ref, w1_ref, b1_ref, w2_ref, b2_ref, g_ref, bb_ref,
                            o_ref, *, d_real, approx):
    # Weights-resident path: whole W1/W2 in VMEM (constant block index -> one DMA),
    # single pass per row tile, no accumulator scratch (direct write-through).
    x = x_ref[...]                                           # native dtype (bf16 MXU path)
    h = jnp.dot(x, w1_ref[...], preferred_element_type=jnp.float32)
    h = _gelu(h + b1_ref[...].astype(jnp.float32), approx).astype(x.dtype)
    y = jnp.dot(h, w2_ref[...], preferred_element_type=jnp.float32)
    y = _gelu(y + b2_ref[...].astype(jnp.float32), approx)
    y = y + x.astype(jnp.float32)                            # residual (dropout == id)
    o_ref[...] = _layernorm(y, g_ref[...], bb_ref[...], d_real).astype(o_ref.dtype)


def _ffn_ln_kernel_stream(x_ref, w1_ref, b1_ref, w2_ref, b2_ref, g_ref, bb_ref,
                          o_ref, acc_ref, *, d_real, approx):
    # Hidden-streaming path: W1/W2 tiled along the hidden dim (grid axis 1),
    # f32 VMEM accumulator, pl.when init/finalize.
    k = pl.program_id(1)

    @pl.when(k == 0)
    def _init():
        acc_ref[...] = jnp.zeros_like(acc_ref)

    x = x_ref[...]
    h = jnp.dot(x, w1_ref[...], preferred_element_type=jnp.float32)
    h = _gelu(h + b1_ref[...].astype(jnp.float32), approx).astype(x.dtype)
    acc_ref[...] += jnp.dot(h, w2_ref[...], preferred_element_type=jnp.float32)

    @pl.when(k == pl.num_programs(1) - 1)
    def _finalize():
        y = _gelu(acc_ref[...] + b2_ref[...].astype(jnp.float32), approx)
        y = y + x_ref[...].astype(jnp.float32)               # residual (dropout == id)
        o_ref[...] = _layernorm(y, g_ref[...], bb_ref[...], d_real).astype(o_ref.dtype)


# ---------------------------------------------------------------------------
# generation-aware VMEM / tile selection
# ---------------------------------------------------------------------------
_TM_CANDIDATES = (1024, 768, 512, 384, 256, 192, 128, 96, 64, 32, 16, 8)


def _tpu_vmem_info():
    """(vmem_capacity_bytes, scoped_vmem_limit_bytes); no global caching so a
    CPU/mock trace can't pin a wrong limit for a later TPU trace."""
    cap = None
    try:
        cap = int(pltpu.get_tpu_info().vmem_capacity_bytes)
    except Exception:
        cap = None
    if not cap:
        kind = ""
        try:
            kind = jax.devices()[0].device_kind.lower()
        except Exception:
            pass
        cap = (64 << 20) if "v7" in kind else (128 << 20)    # v5e/v6e: 128 MiB, v7x: 64 MiB
    limit = int(min(100 << 20, (cap * 3) // 4))              # 96 MiB / 48 MiB scoped limit
    return cap, limit


def _choose_tiles(N, Dp, Hp, x_bytes, w_bytes, vmem_cap, vmem_limit,
                  tm_req=None, th_req=None):
    """Pick (tm, th, weights_resident)."""
    budget = int(vmem_limit * 0.85)
    tm_cap = 512 if vmem_cap <= (64 << 20) else 1024         # 64 MiB v7x vs 128 MiB parts
    rows = _round_up(max(N, 1), 8)

    th_cands = [Hp] + [c for c in (512, 256) if c < Hp and Hp % c == 0]
    if Hp > 128 and Hp % 128 == 0:
        th_cands.append(128)
    if th_req is not None:
        th_req = min(_round_up(th_req, 128), Hp)
        filt = [c for c in th_cands if c <= th_req]
        th_cands = filt or [th_cands[-1]]

    tm_cands = [t for t in _TM_CANDIDATES if t <= tm_cap]
    if tm_req is not None:
        tm_req = max(8, _round_up(tm_req, 8))
        filt = [t for t in tm_cands if t <= tm_req]
        tm_cands = filt or [8]

    def fits(tm, th, resident):
        f = 4 * tm * Dp * x_bytes                 # x + out tiles, double-buffered
        f += 4 * Dp * th * w_bytes                # W1 + W2 tiles, double-buffered
        f += 2 * (th + 3 * Dp) * 4                # biases + LN params (generous)
        if not resident:
            f += tm * Dp * 4                      # f32 accumulator scratch
        f += tm * th * 4 + tm * Dp * 8            # headroom: GELU intermediate + temps
        return f <= budget

    for th in th_cands:
        resident = (th == Hp)
        for tm in tm_cands:
            if tm > rows and tm > 8:
                continue
            if fits(tm, th, resident):
                if resident and rows <= tm and rows >= 16:
                    # Split a lone row tile so both v7x TensorCores get work.
                    tm = max(8, _round_up((rows + 1) // 2, 8))
                return tm, th, resident
    return 8, th_cands[-1], th_cands[-1] == Hp


# ---------------------------------------------------------------------------
# wrapper
# ---------------------------------------------------------------------------
@functools.partial(jax.jit, static_argnames=("tm", "th", "approx_gelu"))
def decoder_ffn_block(x, w1, b1, w2, b2, ln_gamma, ln_beta, *,
                      tm=None, th=None, approx_gelu=False):
    """y = LayerNorm( GELU(GELU(x@W1+b1)@W2+b2) + x )  — DecoderLayer's
    `norm3(dropout3(ffn(x)) + x)` stage in eval mode.  x: (B, S, D)."""
    B, S, D = x.shape
    H = w1.shape[1]
    N = B * S
    Dp = _round_up(D, 128)
    Hp = _round_up(H, 128)

    x_bytes = x.dtype.itemsize
    w_bytes = w1.dtype.itemsize
    vmem_cap, vmem_limit = _tpu_vmem_info()
    tm_sel, th_sel, resident = _choose_tiles(N, Dp, Hp, x_bytes, w_bytes,
                                             vmem_cap, vmem_limit, tm, th)
    Np = _round_up(N, tm_sel)

    # Pads are skipped when shapes are already aligned (no extra HBM pass).
    # Zero padding is exact: GELU(0)=0, padded cols of W/b are zero, padded
    # rows/lanes are sliced off, and LayerNorm masks padded lanes.
    x2d = x.reshape(N, D)
    if Np != N or Dp != D:
        x2d = jnp.pad(x2d, ((0, Np - N), (0, Dp - D)))
    w1p = w1 if (Dp == D and Hp == H) else jnp.pad(w1, ((0, Dp - D), (0, Hp - H)))
    w2p = w2 if (Dp == D and Hp == H) else jnp.pad(w2, ((0, Hp - H), (0, Dp - D)))
    b1p = (b1 if Hp == H else jnp.pad(b1, (0, Hp - H))).reshape(1, Hp)
    b2p = (b2 if Dp == D else jnp.pad(b2, (0, Dp - D))).reshape(1, Dp)
    gp = (ln_gamma if Dp == D else jnp.pad(ln_gamma, (0, Dp - D))).reshape(1, Dp)
    bp = (ln_beta if Dp == D else jnp.pad(ln_beta, (0, Dp - D))).reshape(1, Dp)

    n_row_tiles = Np // tm_sel
    weight_streams = 1 if resident else n_row_tiles
    cost = pl.CostEstimate(
        flops=4 * N * D * H,
        transcendentals=N * (H + D),
        bytes_accessed=int(2 * N * D * x_bytes + weight_streams * 2 * D * H * w_bytes),
    )
    cparams = pltpu.CompilerParams(
        dimension_semantics=("parallel",) if resident else ("parallel", "arbitrary"),
        vmem_limit_bytes=vmem_limit,
    )

    if resident:
        kernel = functools.partial(_ffn_ln_kernel_resident, d_real=D, approx=approx_gelu)
        grid_spec = pltpu.PrefetchScalarGridSpec(
            num_scalar_prefetch=0,
            grid=(n_row_tiles,),
            in_specs=[
                pl.BlockSpec((tm_sel, Dp), lambda i: (i, 0)),   # x rows
                pl.BlockSpec((Dp, Hp), lambda i: (0, 0)),       # W1 (DMA'd once)
                pl.BlockSpec((1, Hp), lambda i: (0, 0)),        # b1
                pl.BlockSpec((Hp, Dp), lambda i: (0, 0)),       # W2 (DMA'd once)
                pl.BlockSpec((1, Dp), lambda i: (0, 0)),        # b2
                pl.BlockSpec((1, Dp), lambda i: (0, 0)),        # LN gamma
                pl.BlockSpec((1, Dp), lambda i: (0, 0)),        # LN beta
            ],
            out_specs=pl.BlockSpec((tm_sel, Dp), lambda i: (i, 0)),
        )
    else:
        kernel = functools.partial(_ffn_ln_kernel_stream, d_real=D, approx=approx_gelu)
        grid_spec = pltpu.PrefetchScalarGridSpec(
            num_scalar_prefetch=0,
            grid=(n_row_tiles, Hp // th_sel),
            in_specs=[
                pl.BlockSpec((tm_sel, Dp), lambda i, k: (i, 0)),   # x rows (resident over k)
                pl.BlockSpec((Dp, th_sel), lambda i, k: (0, k)),   # W1 hidden-column tile
                pl.BlockSpec((1, th_sel), lambda i, k: (0, k)),    # b1 tile
                pl.BlockSpec((th_sel, Dp), lambda i, k: (k, 0)),   # W2 hidden-row tile
                pl.BlockSpec((1, Dp), lambda i, k: (0, 0)),        # b2
                pl.BlockSpec((1, Dp), lambda i, k: (0, 0)),        # LN gamma
                pl.BlockSpec((1, Dp), lambda i, k: (0, 0)),        # LN beta
            ],
            out_specs=pl.BlockSpec((tm_sel, Dp), lambda i, k: (i, 0)),
            scratch_shapes=[pltpu.VMEM((tm_sel, Dp), jnp.float32)],
        )

    out2d = pl.pallas_call(
        kernel,
        out_shape=jax.ShapeDtypeStruct((Np, Dp), x.dtype),
        grid_spec=grid_spec,
        compiler_params=cparams,
        cost_estimate=cost,
    )(x2d, w1p, b1p, w2p, b2p, gp, bp)

    if Np != N or Dp != D:
        out2d = out2d[:N, :D]
    return out2d.reshape(B, S, D)


# ---------------------------------------------------------------------------
# pure-JAX reference
# ---------------------------------------------------------------------------
def _reference(x, w1, b1, w2, b2, gamma, beta, *, approx=False, eps=1e-5):
    h = jax.nn.gelu(x @ w1 + b1, approximate=approx)
    y = jax.nn.gelu(h @ w2 + b2, approximate=approx)
    y = y + x
    mu = jnp.mean(y, axis=-1, keepdims=True)
    var = jnp.mean((y - mu) ** 2, axis=-1, keepdims=True)
    return (y - mu) / jnp.sqrt(var + eps) * gamma + beta


if __name__ == "__main__":
    # --- check 1: small f32 shapes consistent with the module
    #     (batch=2, seq=8, d_model=32, ffn hidden=64); exact-erf GELU. ---
    B, S, D, H = 2, 8, 32, 64
    keys = jax.random.split(jax.random.PRNGKey(0), 7)
    x = jax.random.normal(keys[0], (B, S, D), dtype=jnp.float32)
    bd, bh = 1.0 / math.sqrt(D), 1.0 / math.sqrt(H)
    w1 = jax.random.uniform(keys[1], (D, H), jnp.float32, -bd, bd)
    b1 = jax.random.uniform(keys[2], (H,), jnp.float32, -bd, bd)
    w2 = jax.random.uniform(keys[3], (H, D), jnp.float32, -bh, bh)
    b2 = jax.random.uniform(keys[4], (D,), jnp.float32, -bh, bh)
    gamma = 1.0 + 0.1 * jax.random.normal(keys[5], (D,), dtype=jnp.float32)
    beta = 0.1 * jax.random.normal(keys[6], (D,), dtype=jnp.float32)

    out = jax.block_until_ready(decoder_ffn_block(x, w1, b1, w2, b2, gamma, beta))
    ref = _reference(x, w1, b1, w2, b2, gamma, beta)
    assert out.shape == (B, S, D)
    err1 = float(jnp.max(jnp.abs(out - ref)))
    assert jnp.allclose(out, ref, atol=1e-4, rtol=1e-4), f"f32 mismatch: {err1}"

    # --- check 2: bf16 operands, larger dims; weights-resident fast path. ---
    B2, S2, D2, H2 = 2, 192, 256, 1024
    k = jax.random.split(jax.random.PRNGKey(0), 7)
    x2 = jax.random.normal(k[0], (B2, S2, D2), dtype=jnp.bfloat16)
    c1, c2 = 1.0 / math.sqrt(D2), 1.0 / math.sqrt(H2)
    w1b = jax.random.uniform(k[1], (D2, H2), jnp.float32, -c1, c1).astype(jnp.bfloat16)
    b1b = jax.random.uniform(k[2], (H2,), jnp.float32, -c1, c1).astype(jnp.bfloat16)
    w2b = jax.random.uniform(k[3], (H2, D2), jnp.float32, -c2, c2).astype(jnp.bfloat16)
    b2b = jax.random.uniform(k[4], (D2,), jnp.float32, -c2, c2).astype(jnp.bfloat16)
    g2 = (1.0 + 0.1 * jax.random.normal(k[5], (D2,), jnp.float32)).astype(jnp.bfloat16)
    bt2 = (0.1 * jax.random.normal(k[6], (D2,), jnp.float32)).astype(jnp.bfloat16)

    f32 = lambda a: a.astype(jnp.float32)
    ref2 = _reference(f32(x2), f32(w1b), f32(b1b), f32(w2b), f32(b2b), f32(g2), f32(bt2))
    out2 = jax.block_until_ready(decoder_ffn_block(x2, w1b, b1b, w2b, b2b, g2, bt2))
    assert out2.shape == (B2, S2, D2)
    err2 = float(jnp.max(jnp.abs(f32(out2) - ref2)))
    assert err2 < 5e-2, f"bf16 resident-path mismatch: max abs err {err2}"

    # --- check 3: force hidden-streaming (multi-k, f32 accumulator) path and
    #     the tanh-approximate GELU option. ---
    ref3 = _reference(f32(x2), f32(w1b), f32(b1b), f32(w2b), f32(b2b), f32(g2),
                      f32(bt2), approx=True)
    out3 = jax.block_until_ready(
        decoder_ffn_block(x2, w1b, b1b, w2b, b2b, g2, bt2, th=256, approx_gelu=True))
    err3 = float(jnp.max(jnp.abs(f32(out3) - ref3)))
    assert err3 < 5e-2, f"bf16 streaming-path mismatch: max abs err {err3}"

    print("KERNEL_OK")
</pallas_src>

<mosaic_0001>
module attributes {stable_mosaic.version = 11 : i64} {
  func.func @_ffn_ln_kernel_resident(%arg0: i32, %arg1: memref<8x128xf32, #tpu.memory_space<vmem>>, %arg2: memref<128x128xf32, #tpu.memory_space<vmem>>, %arg3: memref<1x128xf32, #tpu.memory_space<vmem>>, %arg4: memref<128x128xf32, #tpu.memory_space<vmem>>, %arg5: memref<1x128xf32, #tpu.memory_space<vmem>>, %arg6: memref<1x128xf32, #tpu.memory_space<vmem>>, %arg7: memref<1x128xf32, #tpu.memory_space<vmem>>, %arg8: memref<8x128xf32, #tpu.memory_space<vmem>>) attributes {dimension_semantics = [#tpu.dimension_semantics<parallel>], iteration_bounds = array<i64: 2>, scalar_prefetch = 0 : i64, scratch_operands = 0 : i64, tpu.core_type = #tpu.core_type<tc>, window_params = [{transform_indices = @transform_0, window_bounds = array<i64: 8, 128>}, {pipeline_mode = #tpu.pipeline_mode<synchronous>, transform_indices = @transform_1, window_bounds = array<i64: 128, 128>}, {pipeline_mode = #tpu.pipeline_mode<synchronous>, transform_indices = @transform_2, window_bounds = array<i64: 1, 128>}, {pipeline_mode = #tpu.pipeline_mode<synchronous>, transform_indices = @transform_3, window_bounds = array<i64: 128, 128>}, {pipeline_mode = #tpu.pipeline_mode<synchronous>, transform_indices = @transform_4, window_bounds = array<i64: 1, 128>}, {pipeline_mode = #tpu.pipeline_mode<synchronous>, transform_indices = @transform_5, window_bounds = array<i64: 1, 128>}, {pipeline_mode = #tpu.pipeline_mode<synchronous>, transform_indices = @transform_6, window_bounds = array<i64: 1, 128>}, {transform_indices = @transform_7, window_bounds = array<i64: 8, 128>}]} {
    %c0 = arith.constant 0 : index
    %c0_0 = arith.constant 0 : index
    %0 = vector.load %arg1[%c0, %c0_0] : memref<8x128xf32, #tpu.memory_space<vmem>>, vector<8x128xf32>
    %c0_1 = arith.constant 0 : index
    %c0_2 = arith.constant 0 : index
    %1 = vector.load %arg2[%c0_1, %c0_2] : memref<128x128xf32, #tpu.memory_space<vmem>>, vector<128x128xf32>
    %cst = arith.constant dense<0.000000e+00> : vector<8x128xf32>
    %2 = tpu.matmul %0, %1, %cst {dimension_numbers = #tpu.dot_dimension_numbers<[1], [0], [0], [1], [0, 0, 1, 1], [], []>} : vector<8x128xf32>, vector<128x128xf32>, vector<8x128xf32> -> vector<8x128xf32>
    %c0_3 = arith.constant 0 : index
    %c0_4 = arith.constant 0 : index
    %3 = vector.load %arg3[%c0_3, %c0_4] : memref<1x128xf32, #tpu.memory_space<vmem>>, vector<1x128xf32>
    %4 = vector.broadcast %3 : vector<1x128xf32> to vector<8x128xf32>
    %5 = arith.addf %2, %4 : vector<8x128xf32>
    %cst_5 = arith.constant 5.000000e-01 : f32
    %6 = vector.broadcast %cst_5 : f32 to vector<8x128xf32>
    %7 = arith.mulf %6, %5 : vector<8x128xf32>
    %cst_6 = arith.constant 0.707106769 : f32
    %8 = vector.broadcast %cst_6 : f32 to vector<8x128xf32>
    %9 = arith.mulf %5, %8 : vector<8x128xf32>
    %10 = math.erf %9 : vector<8x128xf32>
    %cst_7 = arith.constant 1.000000e+00 : f32
    %11 = vector.broadcast %cst_7 : f32 to vector<8x128xf32>
    %12 = arith.addf %11, %10 : vector<8x128xf32>
    %13 = arith.mulf %7, %12 : vector<8x128xf32>
    %c0_8 = arith.constant 0 : index
    %c0_9 = arith.constant 0 : index
    %14 = vector.load %arg4[%c0_8, %c0_9] : memref<128x128xf32, #tpu.memory_space<vmem>>, vector<128x128xf32>
    %cst_10 = arith.constant dense<0.000000e+00> : vector<8x128xf32>
    %15 = tpu.matmul %13, %14, %cst_10 {dimension_numbers = #tpu.dot_dimension_numbers<[1], [0], [0], [1], [0, 0, 1, 1], [], []>} : vector<8x128xf32>, vector<128x128xf32>, vector<8x128xf32> -> vector<8x128xf32>
    %c0_11 = arith.constant 0 : index
    %c0_12 = arith.constant 0 : index
    %16 = vector.load %arg5[%c0_11, %c0_12] : memref<1x128xf32, #tpu.memory_space<vmem>>, vector<1x128xf32>
    %17 = vector.broadcast %16 : vector<1x128xf32> to vector<8x128xf32>
    %18 = arith.addf %15, %17 : vector<8x128xf32>
    %cst_13 = arith.constant 5.000000e-01 : f32
    %19 = vector.broadcast %cst_13 : f32 to vector<8x128xf32>
    %20 = arith.mulf %19, %18 : vector<8x128xf32>
    %cst_14 = arith.constant 0.707106769 : f32
    %21 = vector.broadcast %cst_14 : f32 to vector<8x128xf32>
    %22 = arith.mulf %18, %21 : vector<8x128xf32>
    %23 = math.erf %22 : vector<8x128xf32>
    %cst_15 = arith.constant 1.000000e+00 : f32
    %24 = vector.broadcast %cst_15 : f32 to vector<8x128xf32>
    %25 = arith.addf %24, %23 : vector<8x128xf32>
    %26 = arith.mulf %20, %25 : vector<8x128xf32>
    %27 = arith.addf %26, %0 : vector<8x128xf32>
    %c0_16 = arith.constant 0 : index
    %c0_17 = arith.constant 0 : index
    %28 = vector.load %arg6[%c0_16, %c0_17] : memref<1x128xf32, #tpu.memory_space<vmem>>, vector<1x128xf32>
    %c0_18 = arith.constant 0 : index
    %c0_19 = arith.constant 0 : index
    %29 = vector.load %arg7[%c0_18, %c0_19] : memref<1x128xf32, #tpu.memory_space<vmem>>, vector<1x128xf32>
    %cst_20 = arith.constant dense<0.000000e+00> : vector<8xf32>
    %30 = vector.multi_reduction <add>, %27, %cst_20 [1] : vector<8x128xf32> to vector<8xf32>
    %31 = vector.shape_cast %30 : vector<8xf32> to vector<8x1xf32>
    %cst_21 = arith.constant 3.125000e-02 : f32
    %32 = vector.broadcast %cst_21 : f32 to vector<8x1xf32>
    %33 = arith.mulf %31, %32 : vector<8x1xf32>
    %34 = vector.broadcast %33 : vector<8x1xf32> to vector<8x128xf32>
    %35 = arith.subf %27, %34 : vector<8x128xf32>
    %36 = tpu.iota {dimensions = array<i32: 1>} : vector<8x128xi32>
    %c32_i32 = arith.constant 32 : i32
    %37 = vector.broadcast %c32_i32 : i32 to vector<8x128xi32>
    %38 = arith.cmpi slt, %36, %37 : vector<8x128xi32>
    %39 = arith.mulf %35, %35 : vector<8x128xf32>
    %cst_22 = arith.constant 0.000000e+00 : f32
    %40 = vector.broadcast %cst_22 : f32 to vector<8x128xf32>
    %41 = arith.select %38, %39, %40 : vector<8x128xi1>, vector<8x128xf32>
    %cst_23 = arith.constant dense<0.000000e+00> : vector<8xf32>
    %42 = vector.multi_reduction <add>, %41, %cst_23 [1] : vector<8x128xf32> to vector<8xf32>
    %43 = vector.shape_cast %42 : vector<8xf32> to vector<8x1xf32>
    %cst_24 = arith.constant 3.125000e-02 : f32
    %44 = vector.broadcast %cst_24 : f32 to vector<8x1xf32>
    %45 = arith.mulf %43, %44 : vector<8x1xf32>
    %cst_25 = arith.constant 9.99999974E-6 : f32
    %46 = vector.broadcast %cst_25 : f32 to vector<8x1xf32>
    %47 = arith.addf %45, %46 : vector<8x1xf32>
    %48 = math.rsqrt %47 : vector<8x1xf32>
    %49 = vector.broadcast %48 : vector<8x1xf32> to vector<8x128xf32>
    %50 = arith.mulf %35, %49 : vector<8x128xf32>
    %51 = vector.broadcast %28 : vector<1x128xf32> to vector<8x128xf32>
    %52 = arith.mulf %50, %51 : vector<8x128xf32>
    %53 = vector.broadcast %29 : vector<1x128xf32> to vector<8x128xf32>
    %54 = arith.addf %52, %53 : vector<8x128xf32>
    %c0_26 = arith.constant 0 : index
    %c0_27 = arith.constant 0 : index
    %55 = vector.load %arg8[%c0_26, %c0_27] : memref<8x128xf32, #tpu.memory_space<vmem>>, vector<8x128xf32>
    tpu.vector_store %arg8[%c0_26, %c0_27], %54 {strides = array<i32>} : memref<8x128xf32, #tpu.memory_space<vmem>>, vector<8x128xf32>,
    return
  }
  func.func @transform_0(%arg0: i32) -> (i32, i32) {
    %c0_i32 = arith.constant 0 : i32
    %c0_i32_0 = arith.constant 0 : i32
    return %arg0, %c0_i32 : i32, i32
  }
  func.func @transform_1(%arg0: i32) -> (i32, i32) {
    %c0_i32 = arith.constant 0 : i32
    %c0_i32_0 = arith.constant 0 : i32
    %c0_i32_1 = arith.constant 0 : i32
    return %c0_i32, %c0_i32_0 : i32, i32
  }
  func.func @transform_2(%arg0: i32) -> (i32, i32) {
    %c0_i32 = arith.constant 0 : i32
    %c0_i32_0 = arith.constant 0 : i32
    %c0_i32_1 = arith.constant 0 : i32
    return %c0_i32, %c0_i32_0 : i32, i32
  }
  func.func @transform_3(%arg0: i32) -> (i32, i32) {
    %c0_i32 = arith.constant 0 : i32
    %c0_i32_0 = arith.constant 0 : i32
    %c0_i32_1 = arith.constant 0 : i32
    return %c0_i32, %c0_i32_0 : i32, i32
  }
  func.func @transform_4(%arg0: i32) -> (i32, i32) {
    %c0_i32 = arith.constant 0 : i32
    %c0_i32_0 = arith.constant 0 : i32
    %c0_i32_1 = arith.constant 0 : i32
    return %c0_i32, %c0_i32_0 : i32, i32
  }
  func.func @transform_5(%arg0: i32) -> (i32, i32) {
    %c0_i32 = arith.constant 0 : i32
    %c0_i32_0 = arith.constant 0 : i32
    %c0_i32_1 = arith.constant 0 : i32
    return %c0_i32, %c0_i32_0 : i32, i32
  }
  func.func @transform_6(%arg0: i32) -> (i32, i32) {
    %c0_i32 = arith.constant 0 : i32
    %c0_i32_0 = arith.constant 0 : i32
    %c0_i32_1 = arith.constant 0 : i32
    return %c0_i32, %c0_i32_0 : i32, i32
  }
  func.func @transform_7(%arg0: i32) -> (i32, i32) {
    %c0_i32 = arith.constant 0 : i32
    %c0_i32_0 = arith.constant 0 : i32
    return %arg0, %c0_i32 : i32, i32
  }
}

</mosaic_0001>

<llo_original>
// kernel: decoder_ffn_block.1
$region0: #{decoder_ffn_block.1}
  #allocation0 [shape = 'u32[]', space=smem, size = 0x4, offset = 0x4, fixed_abs, tag = 'smem constant byte address 0x4 - core index']
  #allocation1 [shape = 'u32[144,128]{1,0:T(1,128)}', space=vmem, size = 0x12000, scoped, tag = 'internal scratch']
  %s0 = inlined_call_operand.hbm [shape: f32[16,128], index: 0, kind: input, shape index: {}]
  %s1 = inlined_call_operand.hbm [shape: f32[128,128], index: 1, kind: input, shape index: {}]
  %s2 = inlined_call_operand.hbm [shape: f32[1,128], index: 2, kind: input, shape index: {}]
  %s3 = inlined_call_operand.hbm [shape: f32[128,128], index: 3, kind: input, shape index: {}]
  %s4 = inlined_call_operand.hbm [shape: f32[1,128], index: 4, kind: input, shape index: {}]
  %s5 = inlined_call_operand.hbm [shape: f32[1,128], index: 5, kind: input, shape index: {}]
  %s6 = inlined_call_operand.hbm [shape: f32[1,128], index: 6, kind: input, shape index: {}]
  %s7 = inlined_call_operand.hbm [shape: f32[16,128], index: 7, kind: output, shape index: {}]
  %s8 = sld [smem:[#allocation0]]
  $region89: #{decoder_ffn_block.1} parent=0
    _
  %s10 = ssub.s32 1, %s8
  %s11 = scalar_select 0, %s10, %s8
  $region1: #{decoder_ffn_block.1} parent=0
    #allocation2 [shape = 'u8[8192]{0}', space=vmem, size = 0x2000, scoped, tag = 'input window, operand 0']
    #allocation3 [shape = 's32[2]{0}', space=sflag, size = 0x8, scoped, tag = 'scoped memory for decoder_ffn_block.1']
    #allocation4 [shape = 's32[2]{0}', space=sflag, size = 0x8, scoped, tag = 'scoped memory for decoder_ffn_block.1']
    #allocation5 [shape = 'u8[65536]{0}', space=vmem, size = 0x10000, scoped, tag = 'input window, operand 1, single buffered']
    #allocation6 [shape = 's32[1]{0}', space=sflag, size = 0x4, scoped, tag = 'scoped memory for decoder_ffn_block.1']
    #allocation7 [shape = 'u8[512]{0}', space=vmem, size = 0x400, scoped, tag = 'input window, operand 2, single buffered']
    #allocation8 [shape = 'u8[65536]{0}', space=vmem, size = 0x10000, scoped, tag = 'input window, operand 3, single buffered']
    #allocation9 [shape = 's32[1]{0}', space=sflag, size = 0x4, scoped, tag = 'scoped memory for decoder_ffn_block.1']
    #allocation10 [shape = 'u8[512]{0}', space=vmem, size = 0x400, scoped, tag = 'input window, operand 4, single buffered']
    #allocation11 [shape = 'u8[512]{0}', space=vmem, size = 0x400, scoped, tag = 'input window, operand 5, single buffered']
    #allocation12 [shape = 's32[1]{0}', space=sflag, size = 0x4, scoped, tag = 'scoped memory for decoder_ffn_block.1']
    #allocation13 [shape = 'u8[512]{0}', space=vmem, size = 0x400, scoped, tag = 'input window, operand 6, single buffered']
    #allocation14 [shape = 'u8[8192]{0}', space=vmem, size = 0x2000, scoped, tag = 'output window, operand 0']
    %12 = vsyncpa [#allocation3], 0
    %s13 = scalar_lea.sflag [#allocation3], 1
    %14 = vsyncpa %s13, 0
    %15 = vsyncpa [#allocation6], 0
    %16 = vsyncpa [#allocation9], 0
    %17 = vsyncpa [#allocation12], 0
    %18 = vsyncpa [#allocation4], 0
    %s19 = scalar_lea.sflag [#allocation4], 1
    %20 = vsyncpa %s19, 0
    loop: start=0, step=1, limit=4
    $region2: #{decoder_ffn_block.1} parent=1 // loop_pre_header
      _
    $region3: #{decoder_ffn_block.1} parent=1 // loop_header
      %s22 = sphi 0, %s26
      %p23 = scmp.ge.s32.totalorder %s22, 4
      %s32 = sphi 0, %s34
      %s35 = sphi 0, %s32
      %s36 = sphi 0, %s35
      %s52 = sphi 0, %s36
      %s56 = sphi 0, %s56
      %s58 = sphi 0, %s56
      %s59 = sphi 0, %s58
      %s73 = sphi 0, %s59
      %s77 = sphi 0, %s77
      %s79 = sphi 0, %s77
      %s80 = sphi 0, %s79
      %s94 = sphi 0, %s80
      %s98 = sphi 0, %s98
      %s100 = sphi 0, %s98
      %s101 = sphi 0, %s100
      %s115 = sphi 0, %s101
      %s119 = sphi 0, %s119
      %s121 = sphi 0, %s119
      %s122 = sphi 0, %s121
      %s136 = sphi 0, %s122
      %s140 = sphi 0, %s140
      %s142 = sphi 0, %s140
      %s143 = sphi 0, %s142
      %s157 = sphi 0, %s143
      %s161 = sphi 0, %s161
      %s163 = sphi 0, %s161
      %s164 = sphi 0, %s163
      %s178 = sphi 0, %s164
      %s184 = sphi 0, %s186
      %s187 = sphi 0, %s184
      %s188 = sphi 0, %s187
      %s204 = sphi 0, %s188
    $region4: #{decoder_ffn_block.1} parent=1 // loop_header_branch
      %25 = sbr.rel (%p23) target = $region8
    $region5: #{decoder_ffn_block.1} parent=1 // loop_body
      %s27 = ssub.s32 %s22, 1
      %s28 = ssub.s32 %s22, 2
      %s29 = sadd.s32 %s22, 1
      %s30 = ssub.s32 %s22, %s29
      %p31 = scmp.eq.s32.totalorder %s30, 0
      %s33 = sadd.s32 %s32, 1
      %s34 = scalar_select %p31, %s32, %s33
      %p37 = pneg %p31
      %p38 = scmp.eq.s32.totalorder %s22, 1
      %p39 = por %p37, %p38
      %p40 = scmp.ne.s32.totalorder %s32, %s35
      %p41 = scmp.eq.s32.totalorder %s22, 0
      %p42 = por %p40, %p41
      %p43 = scmp.ne.s32.totalorder %s32, %s35
      %p44 = scmp.eq.s32.totalorder %s27, 1
      %p45 = por %p43, %p44
      %p46 = scmp.ne.s32.totalorder %s35, %s36
      %p47 = scmp.eq.s32.totalorder %s27, 0
      %p48 = por %p46, %p47
      %p49 = scmp.ne.s32.totalorder %s35, %s36
      %p50 = scmp.eq.s32.totalorder %s28, 1
      %p51 = por %p49, %p50
      %p53 = scmp.ne.s32.totalorder %s36, %s52
      %p54 = scmp.eq.s32.totalorder %s28, 0
      %p55 = por %p53, %p54
      %s57 = sadd.s32 %s56, 1
      %p60 = scmp.eq.s32.totalorder %s22, 1
      %p61 = scmp.ne.s32.totalorder %s56, %s58
      %p62 = scmp.eq.s32.totalorder %s22, 0
      %p63 = por %p61, %p62
      %p64 = scmp.ne.s32.totalorder %s56, %s58
      %p65 = scmp.eq.s32.totalorder %s27, 1
      %p66 = por %p64, %p65
      %p67 = scmp.ne.s32.totalorder %s58, %s59
      %p68 = scmp.eq.s32.totalorder %s27, 0
      %p69 = por %p67, %p68
      %p70 = scmp.ne.s32.totalorder %s58, %s59
      %p71 = scmp.eq.s32.totalorder %s28, 1
      %p72 = por %p70, %p71
      %p74 = scmp.ne.s32.totalorder %s59, %s73
      %p75 = scmp.eq.s32.totalorder %s28, 0
      %p76 = por %p74, %p75
      %s78 = sadd.s32 %s77, 1
      %p81 = scmp.eq.s32.totalorder %s22, 1
      %p82 = scmp.ne.s32.totalorder %s77, %s79
      %p83 = scmp.eq.s32.totalorder %s22, 0
      %p84 = por %p82, %p83
      %p85 = scmp.ne.s32.totalorder %s77, %s79
      %p86 = scmp.eq.s32.totalorder %s27, 1
      %p87 = por %p85, %p86
      %p88 = scmp.ne.s32.totalorder %s79, %s80
      %p89 = scmp.eq.s32.totalorder %s27, 0
      %p90 = por %p88, %p89
      %p91 = scmp.ne.s32.totalorder %s79, %s80
      %p92 = scmp.eq.s32.totalorder %s28, 1
      %p93 = por %p91, %p92
      %p95 = scmp.ne.s32.totalorder %s80, %s94
      %p96 = scmp.eq.s32.totalorder %s28, 0
      %p97 = por %p95, %p96
      %s99 = sadd.s32 %s98, 1
      %p102 = scmp.eq.s32.totalorder %s22, 1
      %p103 = scmp.ne.s32.totalorder %s98, %s100
      %p104 = scmp.eq.s32.totalorder %s22, 0
      %p105 = por %p103, %p104
      %p106 = scmp.ne.s32.totalorder %s98, %s100
      %p107 = scmp.eq.s32.totalorder %s27, 1
      %p108 = por %p106, %p107
      %p109 = scmp.ne.s32.totalorder %s100, %s101
      %p110 = scmp.eq.s32.totalorder %s27, 0
      %p111 = por %p109, %p110
      %p112 = scmp.ne.s32.totalorder %s100, %s101
      %p113 = scmp.eq.s32.totalorder %s28, 1
      %p114 = por %p112, %p113
      %p116 = scmp.ne.s32.totalorder %s101, %s115
      %p117 = scmp.eq.s32.totalorder %s28, 0
      %p118 = por %p116, %p117
      %s120 = sadd.s32 %s119, 1
      %p123 = scmp.eq.s32.totalorder %s22, 1
      %p124 = scmp.ne.s32.totalorder %s119, %s121
      %p125 = scmp.eq.s32.totalorder %s22, 0
      %p126 = por %p124, %p125
      %p127 = scmp.ne.s32.totalorder %s119, %s121
      %p128 = scmp.eq.s32.totalorder %s27, 1
      %p129 = por %p127, %p128
      %p130 = scmp.ne.s32.totalorder %s121, %s122
      %p131 = scmp.eq.s32.totalorder %s27, 0
      %p132 = por %p130, %p131
      %p133 = scmp.ne.s32.totalorder %s121, %s122
      %p134 = scmp.eq.s32.totalorder %s28, 1
      %p135 = por %p133, %p134
      %p137 = scmp.ne.s32.totalorder %s122, %s136
      %p138 = scmp.eq.s32.totalorder %s28, 0
      %p139 = por %p137, %p138
      %s141 = sadd.s32 %s140, 1
      %p144 = scmp.eq.s32.totalorder %s22, 1
      %p145 = scmp.ne.s32.totalorder %s140, %s142
      %p146 = scmp.eq.s32.totalorder %s22, 0
      %p147 = por %p145, %p146
      %p148 = scmp.ne.s32.totalorder %s140, %s142
      %p149 = scmp.eq.s32.totalorder %s27, 1
      %p150 = por %p148, %p149
      %p151 = scmp.ne.s32.totalorder %s142, %s143
      %p152 = scmp.eq.s32.totalorder %s27, 0
      %p153 = por %p151, %p152
      %p154 = scmp.ne.s32.totalorder %s142, %s143
      %p155 = scmp.eq.s32.totalorder %s28, 1
      %p156 = por %p154, %p155
      %p158 = scmp.ne.s32.totalorder %s143, %s157
      %p159 = scmp.eq.s32.totalorder %s28, 0
      %p160 = por %p158, %p159
      %s162 = sadd.s32 %s161, 1
      %p165 = scmp.eq.s32.totalorder %s22, 1
      %p166 = scmp.ne.s32.totalorder %s161, %s163
      %p167 = scmp.eq.s32.totalorder %s22, 0
      %p168 = por %p166, %p167
      %p169 = scmp.ne.s32.totalorder %s161, %s163
      %p170 = scmp.eq.s32.totalorder %s27, 1
      %p171 = por %p169, %p170
      %p172 = scmp.ne.s32.totalorder %s163, %s164
      %p173 = scmp.eq.s32.totalorder %s27, 0
      %p174 = por %p172, %p173
      %p175 = scmp.ne.s32.totalorder %s163, %s164
      %p176 = scmp.eq.s32.totalorder %s28, 1
      %p177 = por %p175, %p176
      %p179 = scmp.ne.s32.totalorder %s164, %s178
      %p180 = scmp.eq.s32.totalorder %s28, 0
      %p181 = por %p179, %p180
      %s182 = ssub.s32 %s22, %s29
      %p183 = scmp.eq.s32.totalorder %s182, 0
      %s185 = sadd.s32 %s184, 1
      %s186 = scalar_select %p183, %s184, %s185
      %p189 = pneg %p183
      %p190 = scmp.eq.s32.totalorder %s22, 1
      %p191 = por %p189, %p190
      %p192 = scmp.ne.s32.totalorder %s184, %s187
      %p193 = scmp.eq.s32.totalorder %s22, 0
      %p194 = por %p192, %p193
      %p195 = scmp.ne.s32.totalorder %s184, %s187
      %p196 = scmp.eq.s32.totalorder %s27, 1
      %p197 = por %p195, %p196
      %p198 = scmp.ne.s32.totalorder %s187, %s188
      %p199 = scmp.eq.s32.totalorder %s27, 0
      %p200 = por %p198, %p199
      %p201 = scmp.ne.s32.totalorder %s187, %s188
      %p202 = scmp.eq.s32.totalorder %s28, 1
      %p203 = por %p201, %p202
      %p205 = scmp.ne.s32.totalorder %s188, %s204
      %p206 = scmp.eq.s32.totalorder %s28, 0
      %p207 = por %p205, %p206
      %p208 = scmp.le.s32.totalorder 1, %s22
      %p209 = scmp.lt.s32.totalorder %s22, 3
      %p210 = pnand %p208, %p209
      %p211 = pneg %p210
      // Predicated region
      $region9: #{decoder_ffn_block.1} parent=5 // pred_check
        _
      $region10: #{decoder_ffn_block.1} parent=5 // pred_check_branch
        %213 = sbr.rel (%p210) target = $region12
      $region11: #{decoder_ffn_block.1} parent=5 // pred_region
        %s214 = ssub.s32 %s22, 1
        // Predicated region
        $region13: #{decoder_ffn_block.1} parent=11 // pred_check
          %p215 = pneg %p69
        $region14: #{decoder_ffn_block.1} parent=11 // pred_check_branch
          %217 = sbr.rel (%p215) target = $region16
        $region15: #{decoder_ffn_block.1} parent=11 // pred_region
          %s219 = ssub.s32 2048, 2048
          %220 = vsyncadd [#allocation6], %s219
          %s221 = sshll.u32 [#allocation5], 4
          %s222 = int_to_ptr.vmem [resolvable:$true] %s221
          %227 = dma.hbm_to_vmem [thread:$0]  %s1, 2048, %s222, [#allocation6], 128, 128, 8
        $region16: #{decoder_ffn_block.1} parent=11 // pred_fallthru
          _
        // Predicated region
        $region17: #{decoder_ffn_block.1} parent=11 // pred_check
          %p228 = pneg %p90
        $region18: #{decoder_ffn_block.1} parent=11 // pred_check_branch
          %230 = sbr.rel (%p228) target = $region20
        $region19: #{decoder_ffn_block.1} parent=11 // pred_region
          %s232 = ssub.s32 16, 16
          %233 = vsyncadd [#allocation6], %s232
          %s235 = sshll.u32 [#allocation7], 4
          %s236 = int_to_ptr.vmem [resolvable:$true] %s235
          %238 = dma.hbm_to_vmem [thread:$0]  %s2, 16, %s236, [#allocation6]
        $region20: #{decoder_ffn_block.1} parent=11 // pred_fallthru
          _
        // Predicated region
        $region21: #{decoder_ffn_block.1} parent=11 // pred_check
          %p239 = pneg %p111
        $region22: #{decoder_ffn_block.1} parent=11 // pred_check_branch
          %241 = sbr.rel (%p239) target = $region24
        $region23: #{decoder_ffn_block.1} parent=11 // pred_region
          %s243 = ssub.s32 2048, 2048
          %244 = vsyncadd [#allocation9], %s243
          %s245 = sshll.u32 [#allocation8], 4
          %s246 = int_to_ptr.vmem [resolvable:$true] %s245
          %251 = dma.hbm_to_vmem [thread:$0]  %s3, 2048, %s246, [#allocation9], 128, 128, 8
        $region24: #{decoder_ffn_block.1} parent=11 // pred_fallthru
          _
        // Predicated region
        $region25: #{decoder_ffn_block.1} parent=11 // pred_check
          %p252 = pneg %p132
        $region26: #{decoder_ffn_block.1} parent=11 // pred_check_branch
          %254 = sbr.rel (%p252) target = $region28
        $region27: #{decoder_ffn_block.1} parent=11 // pred_region
          %s256 = ssub.s32 16, 16
          %257 = vsyncadd [#allocation9], %s256
          %s259 = sshll.u32 [#allocation10], 4
          %s260 = int_to_ptr.vmem [resolvable:$true] %s259
          %262 = dma.hbm_to_vmem [thread:$0]  %s4, 16, %s260, [#allocation9]
        $region28: #{decoder_ffn_block.1} parent=11 // pred_fallthru
          _
        // Predicated region
        $region29: #{decoder_ffn_block.1} parent=11 // pred_check
          %p263 = pneg %p153
        $region30: #{decoder_ffn_block.1} parent=11 // pred_check_branch
          %265 = sbr.rel (%p263) target = $region32
        $region31: #{decoder_ffn_block.1} parent=11 // pred_region
          %s267 = ssub.s32 16, 16
          %268 = vsyncadd [#allocation12], %s267
          %s270 = sshll.u32 [#allocation11], 4
          %s271 = int_to_ptr.vmem [resolvable:$true] %s270
          %273 = dma.hbm_to_vmem [thread:$0]  %s5, 16, %s271, [#allocation12]
        $region32: #{decoder_ffn_block.1} parent=11 // pred_fallthru
          _
        // Predicated region
        $region33: #{decoder_ffn_block.1} parent=11 // pred_check
          %p274 = pneg %p174
        $region34: #{decoder_ffn_block.1} parent=11 // pred_check_branch
          %276 = sbr.rel (%p274) target = $region36
        $region35: #{decoder_ffn_block.1} parent=11 // pred_region
          %s278 = ssub.s32 16, 16
          %279 = vsyncadd [#allocation12], %s278
          %s281 = sshll.u32 [#allocation13], 4
          %s282 = int_to_ptr.vmem [resolvable:$true] %s281
          %284 = dma.hbm_to_vmem [thread:$0]  %s6, 16, %s282, [#allocation12]
        $region36: #{decoder_ffn_block.1} parent=11 // pred_fallthru
          _
      $region12: #{decoder_ffn_block.1} parent=5 // pred_fallthru
        _
      %p285 = scmp.lt.s32.totalorder %s22, 2
      // Predicated region
      $region37: #{decoder_ffn_block.1} parent=5 // pred_check
        %p286 = pneg %p285
      $region38: #{decoder_ffn_block.1} parent=5 // pred_check_branch
        %288 = sbr.rel (%p286) target = $region40
      $region39: #{decoder_ffn_block.1} parent=5 // pred_region
        // Predicated region
        $region41: #{decoder_ffn_block.1} parent=39 // pred_check
          %p289 = pneg %p42
        $region42: #{decoder_ffn_block.1} parent=39 // pred_check_branch
          %291 = sbr.rel (%p289) target = $region44
        $region43: #{decoder_ffn_block.1} parent=39 // pred_region
          %s292 = sand.u32 %s32, 1
          %s293 = scalar_lea.sflag [#allocation3], %s292
          %s294 = sand.u32 %s32, 1
          %s295 = smul.addr %s294, 8
          %s296 = scalar_lea.vmem [#allocation2], %s295
          %s298 = ssub.s32 128, 128
          %299 = vsyncadd %s293, %s298
          %s300 = smul.addr %s22, 128
          %s301 = scalar_lea.hbm %s0, %s300
          %s303 = sshll.u32 %s296, 4
          %s304 = int_to_ptr.vmem [resolvable:$true] %s303
          %306 = dma.hbm_to_vmem [thread:$0]  %s301, 128, %s304, %s293
        $region44: #{decoder_ffn_block.1} parent=39 // pred_fallthru
          _
      $region40: #{decoder_ffn_block.1} parent=5 // pred_fallthru
        _
      %p307 = scmp.le.s32.totalorder 1, %s22
      %p308 = scmp.lt.s32.totalorder %s22, 3
      %p309 = pnand %p307, %p308
      %p310 = pneg %p309
      // Predicated region
      $region45: #{decoder_ffn_block.1} parent=5 // pred_check
        _
      $region46: #{decoder_ffn_block.1} parent=5 // pred_check_branch
        %312 = sbr.rel (%p309) target = $region48
      $region47: #{decoder_ffn_block.1} parent=5 // pred_region
        %s313 = ssub.s32 %s22, 1
        %s314 = sand.u32 %s35, 1
        %s315 = scalar_lea.sflag [#allocation3], %s314
        %s316 = sand.u32 %s35, 1
        %s317 = smul.addr %s316, 8
        %s318 = scalar_lea.vmem [#allocation2], %s317
        // Predicated region
        $region49: #{decoder_ffn_block.1} parent=47 // pred_check
          %p319 = pneg %p48
        $region50: #{decoder_ffn_block.1} parent=47 // pred_check_branch
          %321 = sbr.rel (%p319) target = $region52
        $region51: #{decoder_ffn_block.1} parent=47 // pred_region
          %322 = dma.done %s315, 128
        $region52: #{decoder_ffn_block.1} parent=47 // pred_fallthru
          _
        // Predicated region
        $region53: #{decoder_ffn_block.1} parent=47 // pred_check
          %p323 = pneg %p69
        $region54: #{decoder_ffn_block.1} parent=47 // pred_check_branch
          %325 = sbr.rel (%p323) target = $region56
        $region55: #{decoder_ffn_block.1} parent=47 // pred_region
          %326 = dma.done [#allocation6], 2048
        $region56: #{decoder_ffn_block.1} parent=47 // pred_fallthru
          _
        // Predicated region
        $region57: #{decoder_ffn_block.1} parent=47 // pred_check
          %p327 = pneg %p90
        $region58: #{decoder_ffn_block.1} parent=47 // pred_check_branch
          %329 = sbr.rel (%p327) target = $region60
        $region59: #{decoder_ffn_block.1} parent=47 // pred_region
          %330 = dma.done [#allocation6], 16
        $region60: #{decoder_ffn_block.1} parent=47 // pred_fallthru
          _
        // Predicated region
        $region61: #{decoder_ffn_block.1} parent=47 // pred_check
          %p331 = pneg %p111
        $region62: #{decoder_ffn_block.1} parent=47 // pred_check_branch
          %333 = sbr.rel (%p331) target = $region64
        $region63: #{decoder_ffn_block.1} parent=47 // pred_region
          %334 = dma.done [#allocation9], 2048
        $region64: #{decoder_ffn_block.1} parent=47 // pred_fallthru
          _
        // Predicated region
        $region65: #{decoder_ffn_block.1} parent=47 // pred_check
          %p335 = pneg %p132
        $region66: #{decoder_ffn_block.1} parent=47 // pred_check_branch
          %337 = sbr.rel (%p335) target = $region68
        $region67: #{decoder_ffn_block.1} parent=47 // pred_region
          %338 = dma.done [#allocation9], 16
        $region68: #{decoder_ffn_block.1} parent=47 // pred_fallthru
          _
        // Predicated region
        $region69: #{decoder_ffn_block.1} parent=47 // pred_check
          %p339 = pneg %p153
        $region70: #{decoder_ffn_block.1} parent=47 // pred_check_branch
          %341 = sbr.rel (%p339) target = $region72
        $region71: #{decoder_ffn_block.1} parent=47 // pred_region
          %342 = dma.done [#allocation12], 16
        $region72: #{decoder_ffn_block.1} parent=47 // pred_fallthru
          _
        // Predicated region
        $region73: #{decoder_ffn_block.1} parent=47 // pred_check
          %p343 = pneg %p174
        $region74: #{decoder_ffn_block.1} parent=47 // pred_check_branch
          %345 = sbr.rel (%p343) target = $region76
        $region75: #{decoder_ffn_block.1} parent=47 // pred_region
          %346 = dma.done [#allocation12], 16
        $region76: #{decoder_ffn_block.1} parent=47 // pred_fallthru
          _
        %s347 = sand.u32 %s35, 1
        %s348 = scalar_lea.sflag [#allocation3], %s347
        %s349 = sand.u32 %s35, 1
        %s350 = smul.addr %s349, 8
        %s351 = scalar_lea.vmem [#allocation2], %s350
        %p352 = pneg %p48
        %p353 = pneg %p45
        %p354 = pneg %p69
        %p355 = pneg %p66
        %p356 = pneg %p90
        %p357 = pneg %p87
        %p358 = pneg %p111
        %p359 = pneg %p108
        %p360 = pneg %p132
        %p361 = pneg %p129
        %p362 = pneg %p153
        %p363 = pneg %p150
        %p364 = pneg %p174
        %p365 = pneg %p171
        %p366 = pneg %p200
        %p367 = pneg %p197
        %s368 = sand.u32 %s187, 1
        %s369 = scalar_lea.sflag [#allocation4], %s368
        %s370 = sand.u32 %s187, 1
        %s371 = smul.addr %s370, 8
        %s372 = scalar_lea.vmem [#allocation14], %s371
        %v373 = vld [vmem:[%s318] sm:$0xff]
        %v374 = vld [vmem:[#allocation5] sm:$0xff]
        %v375 = vld [vmem:[#allocation5 + $0x8] sm:$0xff]
        %v376 = vld [vmem:[#allocation5 + $0x10] sm:$0xff]
        %v377 = vld [vmem:[#allocation5 + $0x18] sm:$0xff]
        %v378 = vld [vmem:[#allocation5 + $0x20] sm:$0xff]
        %v379 = vld [vmem:[#allocation5 + $0x28] sm:$0xff]
        %v380 = vld [vmem:[#allocation5 + $0x30] sm:$0xff]
        %v381 = vld [vmem:[#allocation5 + $0x38] sm:$0xff]
        %v382 = vld [vmem:[#allocation5 + $0x40] sm:$0xff]
        %v383 = vld [vmem:[#allocation5 + $0x48] sm:$0xff]
        %v384 = vld [vmem:[#allocation5 + $0x50] sm:$0xff]
        %v385 = vld [vmem:[#allocation5 + $0x58] sm:$0xff]
        %v386 = vld [vmem:[#allocation5 + $0x60] sm:$0xff]
        %v387 = vld [vmem:[#allocation5 + $0x68] sm:$0xff]
        %v388 = vld [vmem:[#allocation5 + $0x70] sm:$0xff]
        %v389 = vld [vmem:[#allocation5 + $0x78] sm:$0xff]
        %v390 = vld [vmem:[#allocation7] sm:$0x1]
        %v392 = vlaneseq
        %v393 = vshrl.u32 %v392, 7
        %v394 = vsub.s32 0, %v393
        %v395 = vrot.slane %v390, %v394
        %397 = vmatprep.subr.mxu0 0.0
        %398 = vmatpush1.msra.mxu0 %v374
        %399 = vmatprep.subr.mxu0 0.0
        %400 = vmatpush1.msra.mxu0 %v375
        %401 = vmatprep.subr.mxu0 0.0
        %402 = vmatpush1.msra.mxu0 %v376
        %403 = vmatprep.subr.mxu0 0.0
        %404 = vmatpush1.msra.mxu0 %v377
        %405 = vmatprep.subr.mxu0 0.0
        %406 = vmatpush1.msra.mxu0 %v378
        %407 = vmatprep.subr.mxu0 0.0
        %408 = vmatpush1.msra.mxu0 %v379
        %409 = vmatprep.subr.mxu0 0.0
        %410 = vmatpush1.msra.mxu0 %v380
        %411 = vmatprep.subr.mxu0 0.0
        %412 = vmatpush1.msra.mxu0 %v381
        %413 = vmatprep.subr.mxu0 0.0
        %414 = vmatpush1.msra.mxu0 %v382
        %415 = vmatprep.subr.mxu0 0.0
        %416 = vmatpush1.msra.mxu0 %v383
        %417 = vmatprep.subr.mxu0 0.0
        %418 = vmatpush1.msra.mxu0 %v384
        %419 = vmatprep.subr.mxu0 0.0
        %420 = vmatpush1.msra.mxu0 %v385
        %421 = vmatprep.subr.mxu0 0.0
        %422 = vmatpush1.msra.mxu0 %v386
        %423 = vmatprep.subr.mxu0 0.0
        %424 = vmatpush1.msra.mxu0 %v387
        %425 = vmatprep.subr.mxu0 0.0
        %426 = vmatpush1.msra.mxu0 %v388
        %427 = vmatprep.subr.mxu0 0.0
        %428 = vmatpush1.msra.mxu0 %v389
        %429 = vmatprep.subr.mxu0 0.0
        %430 = vmatpush1.msra.mxu0 0.0
        %431 = vmatprep.subr.mxu0 0.0
        %432 = vmatpush1.msra.mxu0 0.0
        %433 = vmatprep.subr.mxu0 0.0
        %434 = vmatpush1.msra.mxu0 0.0
        %435 = vmatprep.subr.mxu0 0.0
        %436 = vmatpush1.msra.mxu0 0.0
        %437 = vmatprep.subr.mxu0 0.0
        %438 = vmatpush1.msra.mxu0 0.0
        %439 = vmatprep.subr.mxu0 0.0
        %440 = vmatpush1.msra.mxu0 0.0
        %441 = vmatprep.subr.mxu0 0.0
        %442 = vmatpush1.msra.mxu0 0.0
        %443 = vmatprep.subr.mxu0 0.0
        %444 = vmatpush1.msra.mxu0 0.0
        %445 = vmatprep.subr.mxu0 0.0
        %446 = vmatpush1.msra.mxu0 0.0
        %447 = vmatprep.subr.mxu0 0.0
        %448 = vmatpush1.msra.mxu0 0.0
        %449 = vmatprep.subr.mxu0 0.0
        %450 = vmatpush1.msra.mxu0 0.0
        %451 = vmatprep.subr.mxu0 0.0
        %452 = vmatpush1.msra.mxu0 0.0
        %453 = vmatprep.subr.mxu0 0.0
        %454 = vmatpush1.msra.mxu0 0.0
        %455 = vmatprep.subr.mxu0 0.0
        %456 = vmatpush1.msra.mxu0 0.0
        %457 = vmatprep.subr.mxu0 0.0
        %458 = vmatpush1.msra.mxu0 0.0
        %459 = vmatprep.subr.mxu0 0.0
        %460 = vmatpush1.msra.mxu0 0.0
        %461 = vmatprep.mubr.f32.mxu0 0.0
        %462 = vmatmul.mubr.f32.gmra.mrb[0].mxu0 %v373
        %v463 = vpop.f32.mrb[0].mxu0
        %v464 = vadd.f32 %v395, %v463
        %v465 = vpop.f32.mrb[0].mxu0
        %466 = vdwg.mxu0
        %v467 = vmul.f32 %v464, 0.5
        %v468 = vmul.f32 %v464, 0.70710677
        %v469 = verf.f32.pop %v468
        %v470 = vadd.f32 %v469, 1.0
        %v471 = vmul.f32 %v467, %v470
        %v472 = vld [vmem:[#allocation8] sm:$0xff]
        %v473 = vld [vmem:[#allocation8 + $0x8] sm:$0xff]
        %v474 = vld [vmem:[#allocation8 + $0x10] sm:$0xff]
        %v475 = vld [vmem:[#allocation8 + $0x18] sm:$0xff]
        %v476 = vld [vmem:[#allocation8 + $0x20] sm:$0xff]
        %v477 = vld [vmem:[#allocation8 + $0x28] sm:$0xff]
        %v478 = vld [vmem:[#allocation8 + $0x30] sm:$0xff]
        %v479 = vld [vmem:[#allocation8 + $0x38] sm:$0xff]
        %v480 = vld [vmem:[#allocation8 + $0x40] sm:$0xff]
        %v481 = vld [vmem:[#allocation8 + $0x48] sm:$0xff]
        %v482 = vld [vmem:[#allocation8 + $0x50] sm:$0xff]
        %v483 = vld [vmem:[#allocation8 + $0x58] sm:$0xff]
        %v484 = vld [vmem:[#allocation8 + $0x60] sm:$0xff]
        %v485 = vld [vmem:[#allocation8 + $0x68] sm:$0xff]
        %v486 = vld [vmem:[#allocation8 + $0x70] sm:$0xff]
        %v487 = vld [vmem:[#allocation8 + $0x78] sm:$0xff]
        %v488 = vld [vmem:[#allocation10] sm:$0x1]
        %v490 = vlaneseq
        %v491 = vshrl.u32 %v490, 7
        %v492 = vsub.s32 0, %v491
        %v493 = vrot.slane %v488, %v492
        %495 = vmatprep.subr.mxu0 0.0
        %496 = vmatpush1.msra.mxu0 %v472
        %497 = vmatprep.subr.mxu0 0.0
        %498 = vmatpush1.msra.mxu0 %v473
        %499 = vmatprep.subr.mxu0 0.0
        %500 = vmatpush1.msra.mxu0 %v474
        %501 = vmatprep.subr.mxu0 0.0
        %502 = vmatpush1.msra.mxu0 %v475
        %503 = vmatprep.subr.mxu0 0.0
        %504 = vmatpush1.msra.mxu0 %v476
        %505 = vmatprep.subr.mxu0 0.0
        %506 = vmatpush1.msra.mxu0 %v477
        %507 = vmatprep.subr.mxu0 0.0
        %508 = vmatpush1.msra.mxu0 %v478
        %509 = vmatprep.subr.mxu0 0.0
        %510 = vmatpush1.msra.mxu0 %v479
        %511 = vmatprep.subr.mxu0 0.0
        %512 = vmatpush1.msra.mxu0 %v480
        %513 = vmatprep.subr.mxu0 0.0
        %514 = vmatpush1.msra.mxu0 %v481
        %515 = vmatprep.subr.mxu0 0.0
        %516 = vmatpush1.msra.mxu0 %v482
        %517 = vmatprep.subr.mxu0 0.0
        %518 = vmatpush1.msra.mxu0 %v483
        %519 = vmatprep.subr.mxu0 0.0
        %520 = vmatpush1.msra.mxu0 %v484
        %521 = vmatprep.subr.mxu0 0.0
        %522 = vmatpush1.msra.mxu0 %v485
        %523 = vmatprep.subr.mxu0 0.0
        %524 = vmatpush1.msra.mxu0 %v486
        %525 = vmatprep.subr.mxu0 0.0
        %526 = vmatpush1.msra.mxu0 %v487
        %527 = vmatprep.subr.mxu0 0.0
        %528 = vmatpush1.msra.mxu0 0.0
        %529 = vmatprep.subr.mxu0 0.0
        %530 = vmatpush1.msra.mxu0 0.0
        %531 = vmatprep.subr.mxu0 0.0
        %532 = vmatpush1.msra.mxu0 0.0
        %533 = vmatprep.subr.mxu0 0.0
        %534 = vmatpush1.msra.mxu0 0.0
        %535 = vmatprep.subr.mxu0 0.0
        %536 = vmatpush1.msra.mxu0 0.0
        %537 = vmatprep.subr.mxu0 0.0
        %538 = vmatpush1.msra.mxu0 0.0
        %539 = vmatprep.subr.mxu0 0.0
        %540 = vmatpush1.msra.mxu0 0.0
        %541 = vmatprep.subr.mxu0 0.0
        %542 = vmatpush1.msra.mxu0 0.0
        %543 = vmatprep.subr.mxu0 0.0
        %544 = vmatpush1.msra.mxu0 0.0
        %545 = vmatprep.subr.mxu0 0.0
        %546 = vmatpush1.msra.mxu0 0.0
        %547 = vmatprep.subr.mxu0 0.0
        %548 = vmatpush1.msra.mxu0 0.0
        %549 = vmatprep.subr.mxu0 0.0
        %550 = vmatpush1.msra.mxu0 0.0
        %551 = vmatprep.subr.mxu0 0.0
        %552 = vmatpush1.msra.mxu0 0.0
        %553 = vmatprep.subr.mxu0 0.0
        %554 = vmatpush1.msra.mxu0 0.0
        %555 = vmatprep.subr.mxu0 0.0
        %556 = vmatpush1.msra.mxu0 0.0
        %557 = vmatprep.subr.mxu0 0.0
        %558 = vmatpush1.msra.mxu0 0.0
        %559 = vmatprep.mubr.f32.mxu0 0.0
        %560 = vmatmul.mubr.f32.gmra.mrb[0].mxu0 %v471
        %v561 = vpop.f32.mrb[0].mxu0
        %v562 = vadd.f32 %v493, %v561
        %v563 = vpop.f32.mrb[0].mxu0
        %564 = vdwg.mxu0
        %v565 = vmul.f32 %v562, 0.5
        %v566 = vmul.f32 %v562, 0.70710677
        %v567 = verf.f32.pop %v566
        %v568 = vadd.f32 %v567, 1.0
        %v569 = vmul.f32 %v565, %v568
        %v570 = vadd.f32 %v569, %v373
        %v571 = vld [vmem:[#allocation11] sm:$0x1]
        %v572 = vld [vmem:[#allocation13] sm:$0x1]
        %573 = vadd.xlane.f32.xlu0 %v570
        %v574 = vpop.xlane.xlu0 %573
        %v575 = vmul.f32 %v574, 0.03125
        %v576 = vsub.f32 %v570, %v575
        %v577 = vlaneseq
        %v578 = vand.u32 %v577, 127
        %vm579 = vcmp.lt.s32.totalorder %v578, 32
        %v580 = vmul.f32 %v576, %v576
        %v581 = vsel %vm579, %v580, 0.0
        %582 = vadd.xlane.f32.xlu0 %v581
        %v583 = vpop.xlane.xlu0 %582
        %v584 = vmul.f32 %v583, 0.03125
        %v585 = vadd.f32 %v584, 1e-05
        %v586 = vrsqrt.pop %v585
        %v587 = vmul.f32 %v576, %v586
        %v589 = vlaneseq
        %v590 = vshrl.u32 %v589, 7
        %v591 = vsub.s32 0, %v590
        %v592 = vrot.slane %v571, %v591
        %v594 = vmul.f32 %v587, %v592
        %v596 = vlaneseq
        %v597 = vshrl.u32 %v596, 7
        %v598 = vsub.s32 0, %v597
        %v599 = vrot.slane %v572, %v598
        %v601 = vadd.f32 %v594, %v599
        %602 = vst [vmem:[%s372] sm:$0xff] %v601
        %s603 = sand.u32 %s187, 1
        %s604 = scalar_lea.sflag [#allocation4], %s603
        %s605 = sand.u32 %s187, 1
        %s606 = smul.addr %s605, 8
        %s607 = scalar_lea.vmem [#allocation14], %s606
        // Predicated region
        $region77: #{decoder_ffn_block.1} parent=47 // pred_check
          %p608 = pneg %p197
        $region78: #{decoder_ffn_block.1} parent=47 // pred_check_branch
          %610 = sbr.rel (%p608) target = $region80
        $region79: #{decoder_ffn_block.1} parent=47 // pred_region
          %s612 = ssub.s32 128, 128
          %613 = vsyncadd %s604, %s612
          %s614 = smul.addr %s27, 128
          %s615 = scalar_lea.hbm %s7, %s614
          %s617 = sshll.u32 %s607, 4
          %s618 = int_to_ptr.vmem [resolvable:$true] %s617
          %620 = dma.vmem_to_hbm [thread:$0]  %s618, 128, %s615, %s604
        $region80: #{decoder_ffn_block.1} parent=47 // pred_fallthru
          _
      $region48: #{decoder_ffn_block.1} parent=5 // pred_fallthru
        _
      %p621 = scmp.le.s32.totalorder 2, %s22
      // Predicated region
      $region81: #{decoder_ffn_block.1} parent=5 // pred_check
        %p622 = pneg %p621
      $region82: #{decoder_ffn_block.1} parent=5 // pred_check_branch
        %624 = sbr.rel (%p622) target = $region84
      $region83: #{decoder_ffn_block.1} parent=5 // pred_region
        %s625 = ssub.s32 %s22, 2
        // Predicated region
        $region85: #{decoder_ffn_block.1} parent=83 // pred_check
          %p626 = pneg %p203
        $region86: #{decoder_ffn_block.1} parent=83 // pred_check_branch
          %628 = sbr.rel (%p626) target = $region88
        $region87: #{decoder_ffn_block.1} parent=83 // pred_region
          %s629 = sand.u32 %s188, 1
          %s630 = scalar_lea.sflag [#allocation4], %s629
          %s631 = sand.u32 %s188, 1
          %s632 = smul.addr %s631, 8
          %s633 = scalar_lea.vmem [#allocation14], %s632
          %634 = dma.done %s630, 128
        $region88: #{decoder_ffn_block.1} parent=83 // pred_fallthru
          _
      $region84: #{decoder_ffn_block.1} parent=5 // pred_fallthru
        _
    $region6: #{decoder_ffn_block.1} parent=1 // loop_footer
      %s26 = sadd.s32 1, %s22
    $region7: #{decoder_ffn_block.1} parent=1 // loop_footer_branch
      %21 = sbr.rel target = $region3
    $region8: #{decoder_ffn_block.1} parent=1 // loop_exit
      _
    %635 = vsyncpa [#allocation3], 1
    %s636 = scalar_lea.sflag [#allocation3], 1
    %637 = vsyncpa %s636, 1
    %638 = vsyncpa [#allocation6], 1
    %639 = vsyncpa [#allocation9], 1
    %640 = vsyncpa [#allocation12], 1
    %641 = vsyncpa [#allocation4], 1
    %s642 = scalar_lea.sflag [#allocation4], 1
    %643 = vsyncpa %s642, 1

</llo_original>
